<compile_context>
chip_gen: v7x
topology: tpu7x:2x2x1
jax: 0.10.0
libtpu: 0.0.40
codegen_flags: <defaults>
</compile_context>

<pallas_src>
import math
import functools

import jax
import jax.numpy as jnp
from jax.experimental import pallas as pl
from jax.experimental.pallas import tpu as pltpu

_LANE = 128
_SUBLANE = 8
_MAX_BATCH_TILE = 256                   # sublane-dim tile cap (multiple of 8)
_VMEM_BUDGET_BYTES = 28 * 1024 * 1024   # target live double-buffered footprint
_VMEM_LIMIT_CAP = 48 * 1024 * 1024      # scoped-VMEM request cap (v7x-safe)


def _round_up(n, m):
    return ((n + m - 1) // m) * m


def _round_down(n, m):
    return (n // m) * m


def _make_positional_encoding(max_seq_len: int, d_model: int) -> jnp.ndarray:
    """Deterministic buffer setup (mirrors get_positional_encoding)."""
    position = jnp.arange(max_seq_len, dtype=jnp.float32)[:, None]           # (L, 1)
    div_term = jnp.exp(
        jnp.arange(0, d_model, 2, dtype=jnp.float32) * (-math.log(10000.0) / d_model)
    )                                                                         # (D/2,)
    angles = position * div_term                                              # (L, D/2)
    pe = jnp.zeros((max_seq_len, d_model), dtype=jnp.float32)
    pe = pe.at[:, 0::2].set(jnp.sin(angles))
    pe = pe.at[:, 1::2].set(jnp.cos(angles))
    return pe[None, :, :]                                                     # (1, L, D)


def _pos_enc_kernel(x_ref, pe_ref, o_ref, *, scale):
    # Elementwise hot path; compute in f32 (safe on v5e), store in output dtype.
    o_ref[...] = (
        x_ref[...].astype(jnp.float32) * scale + pe_ref[...].astype(jnp.float32)
    ).astype(o_ref.dtype)


def _compiler_params(footprint_bytes: int) -> pltpu.CompilerParams:
    vmem_limit = int(min(max(footprint_bytes + (8 << 20), 16 << 20), _VMEM_LIMIT_CAP))
    return pltpu.CompilerParams(
        dimension_semantics=("parallel", "parallel"),
        vmem_limit_bytes=vmem_limit,
    )


def _cost_estimate(B: int, S: int, D: int, itemsize: int) -> pl.CostEstimate:
    # read x + pe, write out; one mul + one add per element.
    return pl.CostEstimate(
        flops=2 * B * S * D,
        transcendentals=0,
        bytes_accessed=(2 * B * S * D + S * D) * itemsize,
    )


def _forward_rows(x, pe_full, scale):
    """Row-tiled path for d_model % 128 == 0: sublane- and lane-dense blocks."""
    B, S, D = x.shape
    itemsize = x.dtype.itemsize
    kernel = functools.partial(_pos_enc_kernel, scale=scale)

    if S < _SUBLANE:
        tile_s = S                                   # full-dim block for tiny sequences
    else:
        # x, out, pe each double-buffered -> 6 blocks live.
        budget_rows = _VMEM_BUDGET_BYTES // (6 * itemsize * D)
        tile_s = max(_SUBLANE, _round_down(budget_rows, _SUBLANE))
        tile_s = min(tile_s, _round_up(S, _SUBLANE))

    n_s = pl.cdiv(S, tile_s)
    footprint = 6 * itemsize * tile_s * D

    return pl.pallas_call(
        kernel,
        out_shape=jax.ShapeDtypeStruct((B, S, D), x.dtype),
        grid_spec=pltpu.PrefetchScalarGridSpec(
            num_scalar_prefetch=0,
            # seq tiles outer, batch inner -> pe block is constant over the inner
            # loop and is DMA'd only once per sequence tile.
            grid=(n_s, B),
            in_specs=[
                pl.BlockSpec((1, tile_s, D), lambda s, b: (b, s, 0)),   # x
                pl.BlockSpec((1, tile_s, D), lambda s, b: (0, s, 0)),   # pe
            ],
            out_specs=pl.BlockSpec((1, tile_s, D), lambda s, b: (b, s, 0)),
        ),
        compiler_params=_compiler_params(footprint),
        cost_estimate=_cost_estimate(B, S, D, itemsize),
    )(x, pe_full)


def _forward_flat(x, pe_full, scale):
    """Flat path for d_model not 128-aligned: (S, D) flattened to C = S*D."""
    B, S, D = x.shape
    L = pe_full.shape[1]
    C = S * D
    itemsize = x.dtype.itemsize
    kernel = functools.partial(_pos_enc_kernel, scale=scale)

    x2 = x.reshape(B, C)                     # contiguous -> free reshape
    pe2 = pe_full.reshape(1, L * D)          # free reshape; first C cols == pe[:, :S, :]

    tile_b = B if B <= _MAX_BATCH_TILE else _MAX_BATCH_TILE
    padded_tile_b = _round_up(tile_b, _SUBLANE)     # real sublane footprint when B < 8

    # Budget columns against the PADDED footprint:
    #   x, out double-buffered at padded_tile_b sublanes; pe double-buffered at 8.
    per_col_bytes = 2 * itemsize * (2 * padded_tile_b + _SUBLANE)
    tile_c = _round_down(_VMEM_BUDGET_BYTES // per_col_bytes, _LANE)
    tile_c = max(_LANE, min(tile_c, _round_up(C, _LANE)))   # always a multiple of 128

    n_c = pl.cdiv(C, tile_c)
    n_b = pl.cdiv(B, tile_b)
    footprint = per_col_bytes * tile_c

    out2 = pl.pallas_call(
        kernel,
        out_shape=jax.ShapeDtypeStruct((B, C), x.dtype),
        grid_spec=pltpu.PrefetchScalarGridSpec(
            num_scalar_prefetch=0,
            # column tiles outer, batch inner -> pe DMA'd once per column tile.
            grid=(n_c, n_b),
            in_specs=[
                pl.BlockSpec((tile_b, tile_c), lambda c, b: (b, c)),   # x
                pl.BlockSpec((1, tile_c), lambda c, b: (0, c)),        # pe (bcast over batch)
            ],
            out_specs=pl.BlockSpec((tile_b, tile_c), lambda c, b: (b, c)),
        ),
        compiler_params=_compiler_params(footprint),
        cost_estimate=_cost_estimate(B, S, D, itemsize),
    )(x2, pe2)
    return out2.reshape(B, S, D)


def positional_encoding_forward(x: jnp.ndarray, pe_full: jnp.ndarray) -> jnp.ndarray:
    """x: (B, S, D); pe_full: (1, max_seq_len, D) with max_seq_len >= S."""
    B, S, D = x.shape
    assert pe_full.shape[2] == D, "pe d_model mismatch"
    assert pe_full.shape[1] >= S, "sequence longer than max_seq_len"
    scale = math.sqrt(D)                       # sqrt(d_model), same as the PyTorch module
    pe_full = pe_full.astype(x.dtype)          # one-time cast; halves pe traffic for bf16 x

    if D % _LANE == 0:
        return _forward_rows(x, pe_full, scale)
    return _forward_flat(x, pe_full, scale)


def positional_encoding_reference(x: jnp.ndarray, pe_full: jnp.ndarray) -> jnp.ndarray:
    B, S, D = x.shape
    return x * math.sqrt(D) + pe_full[:, :S, :].astype(x.dtype)


if __name__ == "__main__":
    key = jax.random.PRNGKey(0)

    # Test 1: flat path (d_model=32, not 128-aligned); S*D = 256 -> one dense tile.
    batch, seq_len, d_model, max_seq_len = 2, 8, 32, 64
    x = jax.random.normal(key, (batch, seq_len, d_model), dtype=jnp.float32)
    pe_full = _make_positional_encoding(max_seq_len, d_model)
    out = jax.block_until_ready(positional_encoding_forward(x, pe_full))
    ref = positional_encoding_reference(x, pe_full)
    assert out.shape == (batch, seq_len, d_model)
    assert jnp.allclose(out, ref, atol=1e-5, rtol=1e-5)

    # Test 2: flat path with a ragged (masked) column tile: S*D = 192 < 256-wide block.
    batch2, seq_len2, d_model2, max_seq_len2 = 3, 8, 24, 16
    x2 = jax.random.normal(jax.random.PRNGKey(1), (batch2, seq_len2, d_model2),
                           dtype=jnp.float32)
    pe_full2 = _make_positional_encoding(max_seq_len2, d_model2)
    out2 = jax.block_until_ready(positional_encoding_forward(x2, pe_full2))
    ref2 = positional_encoding_reference(x2, pe_full2)
    assert out2.shape == (batch2, seq_len2, d_model2)
    assert jnp.allclose(out2, ref2, atol=1e-5, rtol=1e-5)

    # Test 3: row-tiled lane-dense path (d_model=128, the common transformer case).
    batch3, seq_len3, d_model3, max_seq_len3 = 2, 16, 128, 32
    x3 = jax.random.normal(jax.random.PRNGKey(2), (batch3, seq_len3, d_model3),
                           dtype=jnp.float32)
    pe_full3 = _make_positional_encoding(max_seq_len3, d_model3)
    out3 = jax.block_until_ready(positional_encoding_forward(x3, pe_full3))
    ref3 = positional_encoding_reference(x3, pe_full3)
    assert out3.shape == (batch3, seq_len3, d_model3)
    assert jnp.allclose(out3, ref3, atol=1e-5, rtol=1e-5)

    print("KERNEL_OK")
</pallas_src>

<mosaic_0001>
module attributes {stable_mosaic.version = 11 : i64} {
  func.func @_pos_enc_kernel(%arg0: i32, %arg1: i32, %arg2: memref<2x256xf32, #tpu.memory_space<vmem>>, %arg3: memref<1x256xf32, #tpu.memory_space<vmem>>, %arg4: memref<2x256xf32, #tpu.memory_space<vmem>>) attributes {dimension_semantics = [#tpu.dimension_semantics<parallel>, #tpu.dimension_semantics<parallel>], iteration_bounds = array<i64: 1, 1>, scalar_prefetch = 0 : i64, scratch_operands = 0 : i64, tpu.core_type = #tpu.core_type<tc>, window_params = [{transform_indices = @transform_0, window_bounds = array<i64: 2, 256>}, {transform_indices = @transform_1, window_bounds = array<i64: 1, 256>}, {transform_indices = @transform_2, window_bounds = array<i64: 2, 256>}]} {
    %c0 = arith.constant 0 : index
    %c0_0 = arith.constant 0 : index
    %0 = vector.load %arg2[%c0, %c0_0] : memref<2x256xf32, #tpu.memory_space<vmem>>, vector<2x256xf32>
    %cst = arith.constant 5.65685415 : f32
    %1 = vector.broadcast %cst : f32 to vector<2x256xf32>
    %2 = arith.mulf %0, %1 : vector<2x256xf32>
    %c0_1 = arith.constant 0 : index
    %c0_2 = arith.constant 0 : index
    %3 = vector.load %arg3[%c0_1, %c0_2] : memref<1x256xf32, #tpu.memory_space<vmem>>, vector<1x256xf32>
    %4 = vector.broadcast %3 : vector<1x256xf32> to vector<2x256xf32>
    %5 = arith.addf %2, %4 : vector<2x256xf32>
    %c0_3 = arith.constant 0 : index
    %c0_4 = arith.constant 0 : index
    %6 = vector.load %arg4[%c0_3, %c0_4] : memref<2x256xf32, #tpu.memory_space<vmem>>, vector<2x256xf32>
    tpu.vector_store %arg4[%c0_3, %c0_4], %5 {strides = array<i32>} : memref<2x256xf32, #tpu.memory_space<vmem>>, vector<2x256xf32>,
    return
  }
  func.func @transform_0(%arg0: i32, %arg1: i32) -> (i32, i32) {
    %c0_i32 = arith.constant 0 : i32
    return %arg1, %arg0 : i32, i32
  }
  func.func @transform_1(%arg0: i32, %arg1: i32) -> (i32, i32) {
    %c0_i32 = arith.constant 0 : i32
    %c0_i32_0 = arith.constant 0 : i32
    return %c0_i32, %arg0 : i32, i32
  }
  func.func @transform_2(%arg0: i32, %arg1: i32) -> (i32, i32) {
    %c0_i32 = arith.constant 0 : i32
    return %arg1, %arg0 : i32, i32
  }
}

</mosaic_0001>

<llo_original>
// kernel: tpu_custom_call.1
$region0: #{tpu_custom_call.1}
  #allocation0 [shape = 'u32[]', space=smem, size = 0x4, offset = 0x4, fixed_abs, tag = 'smem constant byte address 0x4 - core index']
  #allocation1 [shape = 'u32[144,128]{1,0:T(1,128)}', space=vmem, size = 0x12000, scoped, tag = 'internal scratch']
  %s0 = inlined_call_operand.hbm [shape: f32[2,256], index: 0, kind: input, shape index: {}]
  %s1 = inlined_call_operand.hbm [shape: f32[1,2048], index: 1, kind: input, shape index: {}]
  %s2 = inlined_call_operand.hbm [shape: f32[2,256], index: 2, kind: output, shape index: {}]
  %s3 = sld [smem:[#allocation0]]
  $region26: #{tpu_custom_call.1} parent=0
    _
  %s5 = ssub.s32 1, %s3
  %s6 = scalar_select 0, %s5, %s3
  $region1: #{tpu_custom_call.1} parent=0
    #allocation2 [shape = 'u8[2048]{0}', space=vmem, size = 0x800, scoped, tag = 'input window, operand 0, single buffered']
    #allocation3 [shape = 's32[1]{0}', space=sflag, size = 0x4, scoped, tag = 'scoped memory for tpu_custom_call.1']
    #allocation4 [shape = 's32[1]{0}', space=sflag, size = 0x4, scoped, tag = 'scoped memory for tpu_custom_call.1']
    #allocation5 [shape = 'u8[1024]{0}', space=vmem, size = 0x400, scoped, tag = 'input window, operand 1, single buffered']
    #allocation6 [shape = 's32[1]{0}', space=sflag, size = 0x4, scoped, tag = 'scoped memory for tpu_custom_call.1']
    #allocation7 [shape = 'u8[2048]{0}', space=vmem, size = 0x800, scoped, tag = 'output window, operand 0, single buffered']
    %7 = vsyncpa [#allocation3], 0
    %8 = vsyncpa [#allocation6], 0
    %9 = vsyncpa [#allocation4], 0
    // Predicated region
    $region2: #{tpu_custom_call.1} parent=1 // pred_check
      _
    $region3: #{tpu_custom_call.1} parent=1 // pred_check_branch
      %11 = sbr.rel (0) target = $region5
    $region4: #{tpu_custom_call.1} parent=1 // pred_region
      %s13 = ssub.s32 64, 64
      %14 = vsyncadd [#allocation3], %s13
      %s16 = sshll.u32 [#allocation2], 4
      %s17 = int_to_ptr.vmem [resolvable:$true] %s16
      %19 = dma.hbm_to_vmem [thread:$0]  %s0, 64, %s17, [#allocation3]
    $region5: #{tpu_custom_call.1} parent=1 // pred_fallthru
      _
    // Predicated region
    $region6: #{tpu_custom_call.1} parent=1 // pred_check
      _
    $region7: #{tpu_custom_call.1} parent=1 // pred_check_branch
      %21 = sbr.rel (0) target = $region9
    $region8: #{tpu_custom_call.1} parent=1 // pred_region
      %s23 = ssub.s32 32, 32
      %24 = vsyncadd [#allocation6], %s23
      %s26 = sshll.u32 [#allocation5], 4
      %s27 = int_to_ptr.vmem [resolvable:$true] %s26
      %29 = dma.hbm_to_vmem [thread:$0]  %s1, 32, %s27, [#allocation6]
    $region9: #{tpu_custom_call.1} parent=1 // pred_fallthru
      _
    // Predicated region
    $region10: #{tpu_custom_call.1} parent=1 // pred_check
      _
    $region11: #{tpu_custom_call.1} parent=1 // pred_check_branch
      %31 = sbr.rel (0) target = $region13
    $region12: #{tpu_custom_call.1} parent=1 // pred_region
      %32 = dma.done [#allocation3], 64
    $region13: #{tpu_custom_call.1} parent=1 // pred_fallthru
      _
    // Predicated region
    $region14: #{tpu_custom_call.1} parent=1 // pred_check
      _
    $region15: #{tpu_custom_call.1} parent=1 // pred_check_branch
      %34 = sbr.rel (0) target = $region17
    $region16: #{tpu_custom_call.1} parent=1 // pred_region
      %35 = dma.done [#allocation6], 32
    $region17: #{tpu_custom_call.1} parent=1 // pred_fallthru
      _
    %v36 = vld [vmem:[#allocation2] sm:$0xf]
    %v37 = vmul.f32 %v36, 5.656854
    %v38 = vld [vmem:[#allocation5] sm:$0x3]
    %v40 = vlaneseq
    %v41 = vshrl.u32 %v40, 7
    %v42 = vsub.s32 0, %v41
    %v43 = vrot.slane %v38, %v42
    %v44 = vlaneseq
    %v45 = vshrl.u32 %v44, 7
    %v46 = vsub.s32 1, %v45
    %v47 = vrot.slane %v38, %v46
    %v48 = vcombine.low %v43, %v47
    %v50 = vunpack.c.l.s4 1983009808
    %v51 = vunpack.c.0.s8 %v50
    %v52 = vlaneseq
    %v53 = vshrl.u32 %v52, 7
    %v54 = vsub.s32 %v51, %v53
    %v55 = vrot.slane %v48, %v54
    %v57 = vadd.f32 %v37, %v55
    %58 = vst [vmem:[#allocation7] sm:$0xf] %v57
    // Predicated region
    $region18: #{tpu_custom_call.1} parent=1 // pred_check
      _
    $region19: #{tpu_custom_call.1} parent=1 // pred_check_branch
      %60 = sbr.rel (0) target = $region21
    $region20: #{tpu_custom_call.1} parent=1 // pred_region
      %s62 = ssub.s32 64, 64
      %63 = vsyncadd [#allocation4], %s62
      %s65 = sshll.u32 [#allocation7], 4
      %s66 = int_to_ptr.vmem [resolvable:$true] %s65
      %68 = dma.vmem_to_hbm [thread:$0]  %s66, 64, %s2, [#allocation4]
    $region21: #{tpu_custom_call.1} parent=1 // pred_fallthru
      _
    // Predicated region
    $region22: #{tpu_custom_call.1} parent=1 // pred_check
      _
    $region23: #{tpu_custom_call.1} parent=1 // pred_check_branch
      %70 = sbr.rel (0) target = $region25
    $region24: #{tpu_custom_call.1} parent=1 // pred_region
      %71 = dma.done [#allocation4], 64
    $region25: #{tpu_custom_call.1} parent=1 // pred_fallthru
      _
    %72 = vsyncpa [#allocation3], 1
    %73 = vsyncpa [#allocation6], 1
    %74 = vsyncpa [#allocation4], 1

</llo_original>
